<compile_context>
chip_gen: v7x
topology: tpu7x:2x2x1
jax: 0.10.0
libtpu: 0.0.40
codegen_flags: <defaults>
</compile_context>

<pallas_src>
import math

import jax
import jax.numpy as jnp
from jax.experimental import pallas as pl
from jax.experimental.pallas import tpu as pltpu


# Below this many batch rows the pallas_call launch overhead dominates; use XLA.
_PALLAS_MIN_ROWS = 256


def _round_up(x, m):
    return ((x + m - 1) // m) * m


def _bcast_rows_kernel(coeffs_ref, steps_ref, coeffs_out_ref, steps_out_ref):
    # coeffs_ref:      (1, n_dim*n_step*(order+1))        -- lane-dense
    # steps_ref:       (1, (n_step-1)*n_dim)              -- lane-dense, already sigmoid'ed
    # coeffs_out_ref:  (bs_tile, n_dim*n_step*(order+1))  -- batch broadcast
    # steps_out_ref:   (bs_tile, (n_step-1)*n_dim)        -- batch broadcast
    coeffs_out_ref[...] = jnp.broadcast_to(coeffs_ref[...], coeffs_out_ref.shape)
    steps_out_ref[...] = jnp.broadcast_to(steps_ref[...], steps_out_ref.shape)


def sine_forward(coeffs, steps_logit, bs, *, bs_tile=None, use_pallas=None,
                 materialize=True):
    """Forward-pass preprocessing of the `Sine` module.

    Returns (coeffs_b, rhs_b, steps_b):
      coeffs_b: (bs, n_dim, n_step, order+1)   == coeffs repeated over batch
      rhs_b:    (bs, n_dim, n_step)            == ones
      steps_b:  (bs, n_step-1, n_dim)          == sigmoid(steps_logit) repeated

    With materialize=False the batch broadcast is NOT written to HBM; the
    (1, ...) arrays are returned for a consumer that broadcasts on load.
    """
    n_dim, n_step, n_ord = coeffs.shape
    assert steps_logit.shape == (1, n_step - 1, n_dim)
    dtype = coeffs.dtype

    flat_c = n_dim * n_step * n_ord   # 1500
    flat_s = (n_step - 1) * n_dim     # 499

    # Tiny (499 elems); hoisted out of the kernel so the kernel is a pure writer.
    steps_act = jax.nn.sigmoid(steps_logit)

    if not materialize:
        # Structural win: let the downstream ODEINDLayer broadcast on load
        # (its BlockSpec index_map ignores the batch coordinate).
        return (coeffs[None],                                  # (1, n_dim, n_step, order+1)
                jnp.ones((1, n_dim, n_step), dtype=dtype),     # (1, n_dim, n_step)
                steps_act)                                     # (1, n_step-1, n_dim)

    if use_pallas is None:
        use_pallas = bs >= _PALLAS_MIN_ROWS

    if not use_pallas:
        # Launch-overhead-dominated regime: plain XLA broadcast is (near-)free.
        coeffs_b = jnp.broadcast_to(coeffs[None], (bs, n_dim, n_step, n_ord))
        steps_b = jnp.broadcast_to(steps_act, (bs, n_step - 1, n_dim))
        rhs_b = jnp.ones((bs, n_dim, n_step), dtype=dtype)
        return coeffs_b, rhs_b, steps_b

    # ---- Pallas path (store-bound batch broadcast) ----
    # Free, row-major-contiguous flattening to lane-dense 2-D layouts.
    coeffs_flat = coeffs.reshape(1, flat_c)
    steps_flat = steps_act.reshape(1, flat_s)

    if bs_tile is None:
        if bs <= 8:
            bs_tile = bs  # single full-array block (exempt from 8-row rule)
        else:
            # >=2 grid steps so v7x megacore shards stores across both TCs;
            # cap at 512 rows: double-buffered output blocks ~8.2 MiB, safely
            # inside v5e's 16 MiB scoped-VMEM default and v7x's 64 MiB VMEM.
            bs_tile = min(512, _round_up(pl.cdiv(bs, 2), 8))
            bs_tile = min(bs_tile, bs)
    else:
        bs_tile = max(1, min(bs_tile, bs))
        if bs_tile < bs and bs_tile % 8 != 0:
            # Blocks smaller than the array must have a sublane dim % 8 == 0.
            bs_tile = min(_round_up(bs_tile, 8), bs)

    grid = (pl.cdiv(bs, bs_tile),)  # partial last block handled by masked writeback

    out_shapes = (
        jax.ShapeDtypeStruct((bs, flat_c), dtype),
        jax.ShapeDtypeStruct((bs, flat_s), dtype),
    )

    coeffs_b_flat, steps_b_flat = pl.pallas_call(
        _bcast_rows_kernel,
        out_shape=out_shapes,
        grid_spec=pltpu.PrefetchScalarGridSpec(
            num_scalar_prefetch=0,
            grid=grid,
            in_specs=[
                pl.BlockSpec((1, flat_c), lambda b: (0, 0)),
                pl.BlockSpec((1, flat_s), lambda b: (0, 0)),
            ],
            out_specs=[
                pl.BlockSpec((bs_tile, flat_c), lambda b: (b, 0)),
                pl.BlockSpec((bs_tile, flat_s), lambda b: (b, 0)),
            ],
        ),
        compiler_params=pltpu.CompilerParams(dimension_semantics=("parallel",)),
    )(coeffs_flat, steps_flat)

    # Free reshapes back to the module's axis order.
    coeffs_b = coeffs_b_flat.reshape(bs, n_dim, n_step, n_ord)
    steps_b = steps_b_flat.reshape(bs, n_step - 1, n_dim)
    # rhs is all-ones in the module; no need to push it through the kernel.
    rhs_b = jnp.ones((bs, n_dim, n_step), dtype=dtype)
    return coeffs_b, rhs_b, steps_b


class SineJAX:
    """JAX/Pallas port of the `Sine` module's forward-pass preprocessing."""

    def __init__(self, bs=1, key=None):
        if key is None:
            key = jax.random.PRNGKey(0)
        self.step_size = 0.1
        self.end = 500 * self.step_size
        self.n_step = int(self.end / self.step_size)   # 500
        self.order = 2
        self.n_dim = 1
        self.bs = bs
        self.n_iv = 0
        dtype = jnp.float32  # TODO(synk): torch module uses float64 (unsupported on TPU)

        # np.random.random((n_dim, n_step, order+1))  ->  uniform [0, 1)
        self.coeffs = jax.random.uniform(
            key, (self.n_dim, self.n_step, self.order + 1), dtype=dtype)
        self.iv_rhs = None  # n_iv == 0 branch in the reference module
        # steps = logit(step_size * ones(1, n_step-1, n_dim))
        logit = math.log(self.step_size / (1.0 - self.step_size))
        self.steps_logit = jnp.full(
            (1, self.n_step - 1, self.n_dim), logit, dtype=dtype)

    def forward(self, **kwargs):
        coeffs_b, rhs_b, steps_b = sine_forward(
            self.coeffs, self.steps_logit, self.bs, **kwargs)
        # TODO(synk): ODEINDLayer (the constrained / sparse banded ODE linear
        # solve producing u0, u1, u2, eps) is defined in an external module not
        # provided here and has no clean Pallas equivalent; its exact inputs
        # (coeffs_b, rhs_b, iv_rhs=None, steps_b) are produced here.
        return coeffs_b, rhs_b, steps_b


if __name__ == "__main__":
    bs = 2
    model = SineJAX(bs=bs, key=jax.random.PRNGKey(0))

    def reference(bs_):
        ref_coeffs = jnp.broadcast_to(model.coeffs[None], (bs_,) + model.coeffs.shape)
        ref_rhs = jnp.ones((bs_, model.n_dim, model.n_step), dtype=model.coeffs.dtype)
        ref_steps = jnp.broadcast_to(
            jax.nn.sigmoid(model.steps_logit),
            (bs_, model.n_step - 1, model.n_dim))
        return ref_coeffs, ref_rhs, ref_steps

    # 1) Default module forward (bs=2 -> small-batch XLA fast path).
    coeffs_b, rhs_b, steps_b = model.forward()
    jax.block_until_ready((coeffs_b, rhs_b, steps_b))
    ref_c, ref_r, ref_s = reference(bs)
    assert coeffs_b.shape == (bs, model.n_dim, model.n_step, model.order + 1)
    assert rhs_b.shape == (bs, model.n_dim, model.n_step)
    assert steps_b.shape == (bs, model.n_step - 1, model.n_dim)
    assert jnp.allclose(coeffs_b, ref_c, atol=1e-6)
    assert jnp.allclose(rhs_b, ref_r, atol=1e-6)
    assert jnp.allclose(steps_b, ref_s, atol=1e-6)

    # 2) Force the Pallas kernel path at the module's small batch size.
    p_c, p_r, p_s = sine_forward(model.coeffs, model.steps_logit, bs,
                                 use_pallas=True)
    jax.block_until_ready((p_c, p_r, p_s))
    assert jnp.allclose(p_c, ref_c, atol=1e-6)
    assert jnp.allclose(p_r, ref_r, atol=1e-6)
    assert jnp.allclose(p_s, ref_s, atol=1e-6)

    # 3) Pallas kernel path with a tiled batch (exercises multi-step grid /
    #    megacore split: bs=64 -> bs_tile=32, grid=(2,)).
    bs_big = 64
    q_c, q_r, q_s = sine_forward(model.coeffs, model.steps_logit, bs_big,
                                 use_pallas=True)
    jax.block_until_ready((q_c, q_r, q_s))
    ref_c64, ref_r64, ref_s64 = reference(bs_big)
    assert q_c.shape == (bs_big, model.n_dim, model.n_step, model.order + 1)
    assert jnp.allclose(q_c, ref_c64, atol=1e-6)
    assert jnp.allclose(q_r, ref_r64, atol=1e-6)
    assert jnp.allclose(q_s, ref_s64, atol=1e-6)

    # 4) Un-materialized interface (consumer broadcasts on load).
    u_c, u_r, u_s = model.forward(materialize=False)
    jax.block_until_ready((u_c, u_r, u_s))
    assert u_c.shape == (1, model.n_dim, model.n_step, model.order + 1)
    assert u_r.shape == (1, model.n_dim, model.n_step)
    assert u_s.shape == (1, model.n_step - 1, model.n_dim)
    assert jnp.allclose(u_s, jax.nn.sigmoid(model.steps_logit), atol=1e-6)

    print("KERNEL_OK")
</pallas_src>

<mosaic_0001>
module attributes {stable_mosaic.version = 11 : i64} {
  func.func @_bcast_rows_kernel(%arg0: i32, %arg1: memref<1x1500xf32, #tpu.memory_space<vmem>>, %arg2: memref<1x499xf32, #tpu.memory_space<vmem>>, %arg3: memref<2x1500xf32, #tpu.memory_space<vmem>>, %arg4: memref<2x499xf32, #tpu.memory_space<vmem>>) attributes {dimension_semantics = [#tpu.dimension_semantics<parallel>], iteration_bounds = array<i64: 1>, scalar_prefetch = 0 : i64, scratch_operands = 0 : i64, tpu.core_type = #tpu.core_type<tc>, window_params = [{pipeline_mode = #tpu.pipeline_mode<synchronous>, transform_indices = @transform_0, window_bounds = array<i64: 1, 1500>}, {pipeline_mode = #tpu.pipeline_mode<synchronous>, transform_indices = @transform_1, window_bounds = array<i64: 1, 499>}, {transform_indices = @transform_2, window_bounds = array<i64: 2, 1500>}, {transform_indices = @transform_3, window_bounds = array<i64: 2, 499>}]} {
    %c0 = arith.constant 0 : index
    %c0_0 = arith.constant 0 : index
    %0 = vector.load %arg1[%c0, %c0_0] : memref<1x1500xf32, #tpu.memory_space<vmem>>, vector<1x1500xf32>
    %1 = vector.shape_cast %0 : vector<1x1500xf32> to vector<1x1500xf32>
    %2 = vector.broadcast %1 : vector<1x1500xf32> to vector<2x1500xf32>
    %c0_1 = arith.constant 0 : index
    %c0_2 = arith.constant 0 : index
    %3 = vector.load %arg3[%c0_1, %c0_2] : memref<2x1500xf32, #tpu.memory_space<vmem>>, vector<2x1500xf32>
    tpu.vector_store %arg3[%c0_1, %c0_2], %2 {strides = array<i32>} : memref<2x1500xf32, #tpu.memory_space<vmem>>, vector<2x1500xf32>,
    %c0_3 = arith.constant 0 : index
    %c0_4 = arith.constant 0 : index
    %4 = vector.load %arg2[%c0_3, %c0_4] : memref<1x499xf32, #tpu.memory_space<vmem>>, vector<1x499xf32>
    %5 = vector.shape_cast %4 : vector<1x499xf32> to vector<1x499xf32>
    %6 = vector.broadcast %5 : vector<1x499xf32> to vector<2x499xf32>
    %c0_5 = arith.constant 0 : index
    %c0_6 = arith.constant 0 : index
    %7 = vector.load %arg4[%c0_5, %c0_6] : memref<2x499xf32, #tpu.memory_space<vmem>>, vector<2x499xf32>
    tpu.vector_store %arg4[%c0_5, %c0_6], %6 {strides = array<i32>} : memref<2x499xf32, #tpu.memory_space<vmem>>, vector<2x499xf32>,
    return
  }
  func.func @transform_0(%arg0: i32) -> (i32, i32) {
    %c0_i32 = arith.constant 0 : i32
    %c0_i32_0 = arith.constant 0 : i32
    %c0_i32_1 = arith.constant 0 : i32
    return %c0_i32, %c0_i32_0 : i32, i32
  }
  func.func @transform_1(%arg0: i32) -> (i32, i32) {
    %c0_i32 = arith.constant 0 : i32
    %c0_i32_0 = arith.constant 0 : i32
    %c0_i32_1 = arith.constant 0 : i32
    return %c0_i32, %c0_i32_0 : i32, i32
  }
  func.func @transform_2(%arg0: i32) -> (i32, i32) {
    %c0_i32 = arith.constant 0 : i32
    %c0_i32_0 = arith.constant 0 : i32
    return %arg0, %c0_i32 : i32, i32
  }
  func.func @transform_3(%arg0: i32) -> (i32, i32) {
    %c0_i32 = arith.constant 0 : i32
    %c0_i32_0 = arith.constant 0 : i32
    return %arg0, %c0_i32 : i32, i32
  }
}

</mosaic_0001>

<llo_original>
// kernel: tpu_custom_call.1
$region0: #{tpu_custom_call.1}
  #allocation0 [shape = 'u32[]', space=smem, size = 0x4, offset = 0x4, fixed_abs, tag = 'smem constant byte address 0x4 - core index']
  #allocation1 [shape = 'u32[144,128]{1,0:T(1,128)}', space=vmem, size = 0x12000, scoped, tag = 'internal scratch']
  %s0 = inlined_call_operand.hbm [shape: f32[1,1500], index: 0, kind: input, shape index: {}]
  %s1 = inlined_call_operand.hbm [shape: f32[1,499], index: 1, kind: input, shape index: {}]
  %s2 = inlined_call_operand.hbm [shape: f32[2,1500], index: 2, kind: output, shape index: {0}]
  %s3 = inlined_call_operand.hbm [shape: f32[2,499], index: 3, kind: output, shape index: {1}]
  %4 = xla_tuple %s2, %s3
  %s5 = sld [smem:[#allocation0]]
  $region34: #{tpu_custom_call.1} parent=0
    _
  %s7 = ssub.s32 1, %s5
  %s8 = scalar_select 0, %s7, %s5
  $region1: #{tpu_custom_call.1} parent=0
    #allocation2 [shape = 'u8[6144]{0}', space=vmem, size = 0x1800, scoped, tag = 'input window, operand 0, single buffered']
    #allocation3 [shape = 's32[1]{0}', space=sflag, size = 0x4, scoped, tag = 'scoped memory for tpu_custom_call.1']
    #allocation4 [shape = 's32[1]{0}', space=sflag, size = 0x4, scoped, tag = 'scoped memory for tpu_custom_call.1']
    #allocation5 [shape = 'u8[2048]{0}', space=vmem, size = 0x800, scoped, tag = 'input window, operand 1, single buffered']
    #allocation6 [shape = 's32[1]{0}', space=sflag, size = 0x4, scoped, tag = 'scoped memory for tpu_custom_call.1']
    #allocation7 [shape = 'u8[12288]{0}', space=vmem, size = 0x3000, scoped, tag = 'output window, operand 0, single buffered']
    #allocation8 [shape = 'u8[4096]{0}', space=vmem, size = 0x1000, scoped, tag = 'output window, operand 1, single buffered']
    #allocation9 [shape = 's32[1]{0}', space=sflag, size = 0x4, scoped, tag = 'scoped memory for tpu_custom_call.1']
    %9 = vsyncpa [#allocation3], 0
    %10 = vsyncpa [#allocation6], 0
    %11 = vsyncpa [#allocation4], 0
    %12 = vsyncpa [#allocation9], 0
    // Predicated region
    $region2: #{tpu_custom_call.1} parent=1 // pred_check
      _
    $region3: #{tpu_custom_call.1} parent=1 // pred_check_branch
      %14 = sbr.rel (0) target = $region5
    $region4: #{tpu_custom_call.1} parent=1 // pred_region
      %s16 = ssub.s32 192, 192
      %17 = vsyncadd [#allocation3], %s16
      %s19 = sshll.u32 [#allocation2], 4
      %s20 = int_to_ptr.vmem [resolvable:$true] %s19
      %22 = dma.hbm_to_vmem [thread:$0]  %s0, 192, %s20, [#allocation3]
    $region5: #{tpu_custom_call.1} parent=1 // pred_fallthru
      _
    // Predicated region
    $region6: #{tpu_custom_call.1} parent=1 // pred_check
      _
    $region7: #{tpu_custom_call.1} parent=1 // pred_check_branch
      %24 = sbr.rel (0) target = $region9
    $region8: #{tpu_custom_call.1} parent=1 // pred_region
      %s26 = ssub.s32 64, 64
      %27 = vsyncadd [#allocation6], %s26
      %s29 = sshll.u32 [#allocation5], 4
      %s30 = int_to_ptr.vmem [resolvable:$true] %s29
      %32 = dma.hbm_to_vmem [thread:$0]  %s1, 64, %s30, [#allocation6]
    $region9: #{tpu_custom_call.1} parent=1 // pred_fallthru
      _
    // Predicated region
    $region10: #{tpu_custom_call.1} parent=1 // pred_check
      _
    $region11: #{tpu_custom_call.1} parent=1 // pred_check_branch
      %34 = sbr.rel (0) target = $region13
    $region12: #{tpu_custom_call.1} parent=1 // pred_region
      %35 = dma.done [#allocation3], 192
    $region13: #{tpu_custom_call.1} parent=1 // pred_fallthru
      _
    // Predicated region
    $region14: #{tpu_custom_call.1} parent=1 // pred_check
      _
    $region15: #{tpu_custom_call.1} parent=1 // pred_check_branch
      %37 = sbr.rel (0) target = $region17
    $region16: #{tpu_custom_call.1} parent=1 // pred_region
      %38 = dma.done [#allocation6], 64
    $region17: #{tpu_custom_call.1} parent=1 // pred_fallthru
      _
    %v39 = vld [vmem:[#allocation2] sm:$0xff]
    %v40 = vld [vmem:[#allocation2 + $0x8] sm:$0xf]
    %v43 = vlaneseq
    %v44 = vshrl.u32 %v43, 7
    %v45 = vsub.s32 0, %v44
    %v46 = vrot.slane %v39, %v45
    %v47 = vlaneseq
    %v48 = vshrl.u32 %v47, 7
    %v49 = vsub.s32 1, %v48
    %v50 = vrot.slane %v39, %v49
    %v51 = vlaneseq
    %v52 = vshrl.u32 %v51, 7
    %v53 = vsub.s32 2, %v52
    %v54 = vrot.slane %v39, %v53
    %v55 = vlaneseq
    %v56 = vshrl.u32 %v55, 7
    %v57 = vsub.s32 3, %v56
    %v58 = vrot.slane %v39, %v57
    %v59 = vlaneseq
    %v60 = vshrl.u32 %v59, 7
    %v61 = vsub.s32 4, %v60
    %v62 = vrot.slane %v39, %v61
    %v63 = vlaneseq
    %v64 = vshrl.u32 %v63, 7
    %v65 = vsub.s32 5, %v64
    %v66 = vrot.slane %v39, %v65
    %v67 = vlaneseq
    %v68 = vshrl.u32 %v67, 7
    %v69 = vsub.s32 6, %v68
    %v70 = vrot.slane %v39, %v69
    %v71 = vlaneseq
    %v72 = vshrl.u32 %v71, 7
    %v73 = vsub.s32 7, %v72
    %v74 = vrot.slane %v39, %v73
    %v75 = vlaneseq
    %v76 = vshrl.u32 %v75, 7
    %v77 = vsub.s32 0, %v76
    %v78 = vrot.slane %v40, %v77
    %v79 = vlaneseq
    %v80 = vshrl.u32 %v79, 7
    %v81 = vsub.s32 1, %v80
    %v82 = vrot.slane %v40, %v81
    %v83 = vlaneseq
    %v84 = vshrl.u32 %v83, 7
    %v85 = vsub.s32 2, %v84
    %v86 = vrot.slane %v40, %v85
    %v87 = vlaneseq
    %v88 = vshrl.u32 %v87, 7
    %v89 = vsub.s32 3, %v88
    %v90 = vrot.slane %v40, %v89
    %v91 = vcombine.low %v46, %v50
    %v92 = vcombine.low %v54, %v58
    %v94 = vunpack.c.l.s4 1983009808
    %v95 = vunpack.c.0.s8 %v94
    %v96 = vlaneseq
    %v97 = vshrl.u32 %v96, 7
    %v98 = vsub.s32 %v95, %v97
    %v99 = vrot.slane %v91, %v98
    %v101 = vunpack.c.l.s4 1983009808
    %v102 = vunpack.c.0.s8 %v101
    %v103 = vlaneseq
    %v104 = vshrl.u32 %v103, 7
    %v105 = vsub.s32 %v102, %v104
    %v106 = vrot.slane %v92, %v105
    %v107 = vcombine.low %v99, %v106
    %v108 = vcombine.low %v62, %v66
    %v109 = vcombine.low %v70, %v74
    %v111 = vunpack.c.l.s4 1983009808
    %v112 = vunpack.c.0.s8 %v111
    %v113 = vlaneseq
    %v114 = vshrl.u32 %v113, 7
    %v115 = vsub.s32 %v112, %v114
    %v116 = vrot.slane %v108, %v115
    %v118 = vunpack.c.l.s4 1983009808
    %v119 = vunpack.c.0.s8 %v118
    %v120 = vlaneseq
    %v121 = vshrl.u32 %v120, 7
    %v122 = vsub.s32 %v119, %v121
    %v123 = vrot.slane %v109, %v122
    %v124 = vcombine.low %v116, %v123
    %v125 = vcombine.low %v78, %v82
    %v126 = vcombine.low %v86, %v90
    %v128 = vunpack.c.l.s4 1983009808
    %v129 = vunpack.c.0.s8 %v128
    %v130 = vlaneseq
    %v131 = vshrl.u32 %v130, 7
    %v132 = vsub.s32 %v129, %v131
    %v133 = vrot.slane %v125, %v132
    %v135 = vunpack.c.l.s4 1983009808
    %v136 = vunpack.c.0.s8 %v135
    %v137 = vlaneseq
    %v138 = vshrl.u32 %v137, 7
    %v139 = vsub.s32 %v136, %v138
    %v140 = vrot.slane %v126, %v139
    %v141 = vcombine.low %v133, %v140
    %145 = vst [vmem:[#allocation7] sm:$0xff] %v107
    %146 = vst [vmem:[#allocation7 + $0x8] sm:$0xff] %v124
    %vm147 = vcmask 1041408
    %vm148 = vcmask 1043458
    %vm149 = vmor %vm148, %vm147
    %vm150 = vcmask 1045508
    %vm151 = vmor %vm150, %vm149
    %vm152 = vcmask 752646
    %vm153 = vmor %vm152, %vm151
    %154 = vst.msk [vmem:[#allocation7 + $0x10] sm:$0xff] %vm153, %v141
    %v155 = vld [vmem:[#allocation5] sm:$0xf]
    %v157 = vlaneseq
    %v158 = vshrl.u32 %v157, 7
    %v159 = vsub.s32 0, %v158
    %v160 = vrot.slane %v155, %v159
    %v161 = vlaneseq
    %v162 = vshrl.u32 %v161, 7
    %v163 = vsub.s32 1, %v162
    %v164 = vrot.slane %v155, %v163
    %v165 = vlaneseq
    %v166 = vshrl.u32 %v165, 7
    %v167 = vsub.s32 2, %v166
    %v168 = vrot.slane %v155, %v167
    %v169 = vlaneseq
    %v170 = vshrl.u32 %v169, 7
    %v171 = vsub.s32 3, %v170
    %v172 = vrot.slane %v155, %v171
    %v173 = vcombine.low %v160, %v164
    %v174 = vcombine.low %v168, %v172
    %v176 = vunpack.c.l.s4 1983009808
    %v177 = vunpack.c.0.s8 %v176
    %v178 = vlaneseq
    %v179 = vshrl.u32 %v178, 7
    %v180 = vsub.s32 %v177, %v179
    %v181 = vrot.slane %v173, %v180
    %v183 = vunpack.c.l.s4 1983009808
    %v184 = vunpack.c.0.s8 %v183
    %v185 = vlaneseq
    %v186 = vshrl.u32 %v185, 7
    %v187 = vsub.s32 %v184, %v186
    %v188 = vrot.slane %v174, %v187
    %v189 = vcombine.low %v181, %v188
    %vm191 = vcmask 941062
    %vm192 = vmor %vm191, %vm151
    %193 = vst.msk [vmem:[#allocation8] sm:$0xff] %vm192, %v189
    // Predicated region
    $region18: #{tpu_custom_call.1} parent=1 // pred_check
      _
    $region19: #{tpu_custom_call.1} parent=1 // pred_check_branch
      %195 = sbr.rel (0) target = $region21
    $region20: #{tpu_custom_call.1} parent=1 // pred_region
      %s197 = ssub.s32 384, 384
      %198 = vsyncadd [#allocation4], %s197
      %s200 = sshll.u32 [#allocation7], 4
      %s201 = int_to_ptr.vmem [resolvable:$true] %s200
      %203 = dma.vmem_to_hbm [thread:$0]  %s201, 384, %s2, [#allocation4]
    $region21: #{tpu_custom_call.1} parent=1 // pred_fallthru
      _
    // Predicated region
    $region22: #{tpu_custom_call.1} parent=1 // pred_check
      _
    $region23: #{tpu_custom_call.1} parent=1 // pred_check_branch
      %205 = sbr.rel (0) target = $region25
    $region24: #{tpu_custom_call.1} parent=1 // pred_region
      %s207 = ssub.s32 128, 128
      %208 = vsyncadd [#allocation9], %s207
      %s210 = sshll.u32 [#allocation8], 4
      %s211 = int_to_ptr.vmem [resolvable:$true] %s210
      %213 = dma.vmem_to_hbm [thread:$0]  %s211, 128, %s3, [#allocation9]
    $region25: #{tpu_custom_call.1} parent=1 // pred_fallthru
      _
    // Predicated region
    $region26: #{tpu_custom_call.1} parent=1 // pred_check
      _
    $region27: #{tpu_custom_call.1} parent=1 // pred_check_branch
      %215 = sbr.rel (0) target = $region29
    $region28: #{tpu_custom_call.1} parent=1 // pred_region
      %216 = dma.done [#allocation4], 384
    $region29: #{tpu_custom_call.1} parent=1 // pred_fallthru
      _
    // Predicated region
    $region30: #{tpu_custom_call.1} parent=1 // pred_check
      _
    $region31: #{tpu_custom_call.1} parent=1 // pred_check_branch
      %218 = sbr.rel (0) target = $region33
    $region32: #{tpu_custom_call.1} parent=1 // pred_region
      %219 = dma.done [#allocation9], 128
    $region33: #{tpu_custom_call.1} parent=1 // pred_fallthru
      _
    %220 = vsyncpa [#allocation3], 1
    %221 = vsyncpa [#allocation6], 1
    %222 = vsyncpa [#allocation4], 1
    %223 = vsyncpa [#allocation9], 1

</llo_original>
